<compile_context>
chip_gen: v7x
topology: tpu7x:2x2x1
jax: 0.10.0
libtpu: 0.0.40
codegen_flags: <defaults>
</compile_context>

<pallas_src>
import functools

import jax
import jax.numpy as jnp
from jax.experimental import pallas as pl
from jax.experimental.pallas import tpu as pltpu


def ngram_lm_kernel(idx_ref,        # (TB, C)    int32  token ids
                    emb_rep_ref,    # (C*V, C*E) bf16   block-diag replicated embedding table
                    w1_ref,         # (C*E, H)   bf16
                    b1_ref,         # (1, H)     f32
                    w2_ref,         # (H, V)     bf16
                    b2_ref,         # (1, V)     f32
                    out_ref,        # (TB, V)    f32
                    *, context_size, vocab_size):
    tb = idx_ref.shape[0]
    cv = emb_rep_ref.shape[0]

    # ---- 1. Build the (TB, C*V) one-hot selector on the VPU (no DMA, no gather). ----
    idx = idx_ref[...]                                              # (TB, C) int32
    iota = jax.lax.broadcasted_iota(jnp.int32, (tb, cv), 1)         # lane ids 0..C*V-1
    hit = None
    for k in range(context_size):                                   # tiny static loop
        target = idx[:, k:k + 1] + k * vocab_size                   # (TB, 1), lands in block k
        match_k = iota == target                                    # (TB, C*V) bool
        hit = match_k if hit is None else jnp.logical_or(hit, match_k)
    onehot = hit.astype(jnp.bfloat16)

    # ---- 2. Embedding lookup + concat as ONE MXU matmul: x = onehot @ blkdiag(emb). ----
    x = jnp.dot(onehot, emb_rep_ref[...],
                preferred_element_type=jnp.float32)                 # (TB, C*E), exact row-select

    # ---- 3. First layer: fused K=C*E matmul, bf16 in / f32 accumulate, ReLU in f32. ----
    h = jnp.dot(x.astype(jnp.bfloat16), w1_ref[...],
                preferred_element_type=jnp.float32) + b1_ref[...]
    h = jnp.maximum(h, 0.0)

    # ---- 4. Second layer: (TB, H) @ (H, V). ----
    logits = jnp.dot(h.astype(jnp.bfloat16), w2_ref[...],
                     preferred_element_type=jnp.float32) + b2_ref[...]

    # ---- 5. log_softmax over the vocab axis (f32, max-shifted). ----
    m = jnp.max(logits, axis=1, keepdims=True)
    shifted = logits - m
    lse = jnp.log(jnp.sum(jnp.exp(shifted), axis=1, keepdims=True))
    out_ref[...] = shifted - lse


def _round_up(x, m):
    return ((x + m - 1) // m) * m


def ngram_lm_forward_batched(indices, emb, w1_t, b1, w2_t, b2, *, batch_tile=None):
    """indices: (B, C) int.  Returns (B, V) f32 log-probs."""
    V, E = emb.shape
    B, C = indices.shape
    H = b1.shape[-1]
    CE, CV = C * E, C * V

    # Clip so an invalid token can never select out of range.
    idx = jnp.clip(indices, 0, V - 1).astype(jnp.int32)

    if batch_tile is None:
        if B <= 8:
            batch_tile = B                       # single step; block == full array
        else:
            # Fill the MXU sublane (M) dim, but keep >= 2 grid steps so both v7x
            # TensorCores get work under dimension_semantics=("parallel",).
            batch_tile = min(256, _round_up(-(-B // 2), 8))
    if batch_tile < B and batch_tile % 8 != 0:
        batch_tile = _round_up(batch_tile, 8)

    B_pad = _round_up(B, batch_tile)
    if B_pad != B:
        idx = jnp.pad(idx, ((0, B_pad - B), (0, 0)))   # pad with token 0 (valid), sliced off below

    # Block-diagonal replication of the table: emb_rep[k*V + v, k*E:(k+1)*E] = emb[v].
    # For the module's shapes this is C*V*C*E*2 bytes = 128 KiB of VMEM -- trivially resident.
    emb_rep = jnp.kron(jnp.eye(C, dtype=jnp.float32),
                       emb.astype(jnp.float32)).astype(jnp.bfloat16)     # (C*V, C*E)
    w1_bf = w1_t.astype(jnp.bfloat16)                                     # (C*E, H)
    w2_bf = w2_t.astype(jnp.bfloat16)                                     # (H, V)
    b1_r = b1.reshape(1, H).astype(jnp.float32)
    b2_r = b2.reshape(1, V).astype(jnp.float32)

    kernel = functools.partial(ngram_lm_kernel, context_size=C, vocab_size=V)

    out = pl.pallas_call(
        kernel,
        out_shape=jax.ShapeDtypeStruct((B_pad, V), jnp.float32),
        grid=(B_pad // batch_tile,),
        in_specs=[
            pl.BlockSpec((batch_tile, C), lambda i: (i, 0)),   # token ids (VMEM block)
            # Constant index_maps: these blocks are DMA'd once and stay VMEM-resident.
            pl.BlockSpec((CV, CE), lambda i: (0, 0)),          # block-diag emb (bf16)
            pl.BlockSpec((CE, H), lambda i: (0, 0)),           # W1 (bf16)
            pl.BlockSpec((1, H), lambda i: (0, 0)),            # b1
            pl.BlockSpec((H, V), lambda i: (0, 0)),            # W2 (bf16)
            pl.BlockSpec((1, V), lambda i: (0, 0)),            # b2
        ],
        out_specs=pl.BlockSpec((batch_tile, V), lambda i: (i, 0)),
        compiler_params=pltpu.CompilerParams(
            dimension_semantics=("parallel",)),                # batch tiles across TCs (v7x)
    )(idx, emb_rep, w1_bf, b1_r, w2_bf, b2_r)

    return out[:B]


def ngram_lm_forward(indices, emb, w1_t, b1, w2_t, b2):
    """Module-semantics forward: indices (C,) int -> (1, V) log-probs (matches torch)."""
    return ngram_lm_forward_batched(indices[None, :], emb, w1_t, b1, w2_t, b2)


def ngram_lm_reference(indices, emb, w1_t, b1, w2_t, b2):
    """Pure-JAX f32 reference. indices: (B, C)."""
    embeds = emb[indices].reshape(indices.shape[0], -1)
    h = jax.nn.relu(embeds @ w1_t + b1)
    logits = h @ w2_t + b2
    return jax.nn.log_softmax(logits, axis=-1)


if __name__ == "__main__":
    # Small shapes consistent with the module's forward.
    vocab_size = 128
    embedding_dim = 32
    context_size = 4
    hidden = 256

    key = jax.random.PRNGKey(0)
    k_emb, k_w1, k_b1, k_w2, k_b2, k_idx, k_idx_b = jax.random.split(key, 7)

    emb = jax.random.normal(k_emb, (vocab_size, embedding_dim), jnp.float32) * 0.1
    # Stored already transposed vs. PyTorch's (out, in) convention.
    w1_t = jax.random.normal(k_w1, (context_size * embedding_dim, hidden), jnp.float32) * 0.05
    b1 = jax.random.normal(k_b1, (hidden,), jnp.float32) * 0.01
    w2_t = jax.random.normal(k_w2, (hidden, vocab_size), jnp.float32) * 0.05
    b2 = jax.random.normal(k_b2, (vocab_size,), jnp.float32) * 0.01

    # --- module-semantics single-example forward: (C,) -> (1, V) ---
    indices = jax.random.randint(k_idx, (context_size,), 0, vocab_size, jnp.int32)
    log_probs = ngram_lm_forward(indices, emb, w1_t, b1, w2_t, b2)
    log_probs = jax.block_until_ready(log_probs)
    ref = ngram_lm_reference(indices[None, :], emb, w1_t, b1, w2_t, b2)
    assert log_probs.shape == (1, vocab_size)
    # bf16 weights/activations in the matmuls -> loosened tolerance vs. the f32 reference.
    assert jnp.allclose(log_probs, ref, atol=2e-2, rtol=2e-2), (
        f"max abs diff {jnp.max(jnp.abs(log_probs - ref))}")

    # --- batched path: >= 2 grid steps, MXU sublane dim filled by the batch tile ---
    batch = 16
    idx_batch = jax.random.randint(k_idx_b, (batch, context_size), 0, vocab_size, jnp.int32)
    out_b = ngram_lm_forward_batched(idx_batch, emb, w1_t, b1, w2_t, b2)
    out_b = jax.block_until_ready(out_b)
    ref_b = ngram_lm_reference(idx_batch, emb, w1_t, b1, w2_t, b2)
    assert out_b.shape == (batch, vocab_size)
    assert jnp.allclose(out_b, ref_b, atol=2e-2, rtol=2e-2), (
        f"max abs diff {jnp.max(jnp.abs(out_b - ref_b))}")

    print("KERNEL_OK")
</pallas_src>

<mosaic_0001>
module attributes {stable_mosaic.version = 11 : i64} {
  func.func @ngram_lm_kernel(%arg0: i32, %arg1: memref<1x4xi32, #tpu.memory_space<vmem>>, %arg2: memref<512x128xbf16, #tpu.memory_space<vmem>>, %arg3: memref<128x256xbf16, #tpu.memory_space<vmem>>, %arg4: memref<1x256xf32, #tpu.memory_space<vmem>>, %arg5: memref<256x128xbf16, #tpu.memory_space<vmem>>, %arg6: memref<1x128xf32, #tpu.memory_space<vmem>>, %arg7: memref<1x128xf32, #tpu.memory_space<vmem>>) attributes {dimension_semantics = [#tpu.dimension_semantics<parallel>], iteration_bounds = array<i64: 1>, scalar_prefetch = 0 : i64, scratch_operands = 0 : i64, tpu.core_type = #tpu.core_type<tc>, window_params = [{transform_indices = @transform_0, window_bounds = array<i64: 1, 4>}, {pipeline_mode = #tpu.pipeline_mode<synchronous>, transform_indices = @transform_1, window_bounds = array<i64: 512, 128>}, {pipeline_mode = #tpu.pipeline_mode<synchronous>, transform_indices = @transform_2, window_bounds = array<i64: 128, 256>}, {pipeline_mode = #tpu.pipeline_mode<synchronous>, transform_indices = @transform_3, window_bounds = array<i64: 1, 256>}, {pipeline_mode = #tpu.pipeline_mode<synchronous>, transform_indices = @transform_4, window_bounds = array<i64: 256, 128>}, {pipeline_mode = #tpu.pipeline_mode<synchronous>, transform_indices = @transform_5, window_bounds = array<i64: 1, 128>}, {transform_indices = @transform_6, window_bounds = array<i64: 1, 128>}]} {
    %c0 = arith.constant 0 : index
    %c0_0 = arith.constant 0 : index
    %0 = vector.load %arg1[%c0, %c0_0] : memref<1x4xi32, #tpu.memory_space<vmem>>, vector<1x4xi32>
    %1 = tpu.iota {dimensions = array<i32: 1>} : vector<1x512xi32>
    %2 = vector.extract_strided_slice %0 {offsets = [0, 0], sizes = [1, 1], strides = [1, 1]} : vector<1x4xi32> to vector<1x1xi32>
    %c0_i32 = arith.constant 0 : i32
    %3 = vector.broadcast %c0_i32 : i32 to vector<1x1xi32>
    %4 = arith.addi %2, %3 : vector<1x1xi32>
    %5 = vector.broadcast %4 : vector<1x1xi32> to vector<1x512xi32>
    %6 = arith.cmpi eq, %1, %5 : vector<1x512xi32>
    %7 = vector.extract_strided_slice %0 {offsets = [0, 1], sizes = [1, 1], strides = [1, 1]} : vector<1x4xi32> to vector<1x1xi32>
    %c128_i32 = arith.constant 128 : i32
    %8 = vector.broadcast %c128_i32 : i32 to vector<1x1xi32>
    %9 = arith.addi %7, %8 : vector<1x1xi32>
    %10 = vector.broadcast %9 : vector<1x1xi32> to vector<1x512xi32>
    %11 = arith.cmpi eq, %1, %10 : vector<1x512xi32>
    %12 = arith.ori %6, %11 : vector<1x512xi1>
    %13 = vector.extract_strided_slice %0 {offsets = [0, 2], sizes = [1, 1], strides = [1, 1]} : vector<1x4xi32> to vector<1x1xi32>
    %c256_i32 = arith.constant 256 : i32
    %14 = vector.broadcast %c256_i32 : i32 to vector<1x1xi32>
    %15 = arith.addi %13, %14 : vector<1x1xi32>
    %16 = vector.broadcast %15 : vector<1x1xi32> to vector<1x512xi32>
    %17 = arith.cmpi eq, %1, %16 : vector<1x512xi32>
    %18 = arith.ori %12, %17 : vector<1x512xi1>
    %19 = vector.extract_strided_slice %0 {offsets = [0, 3], sizes = [1, 1], strides = [1, 1]} : vector<1x4xi32> to vector<1x1xi32>
    %c384_i32 = arith.constant 384 : i32
    %20 = vector.broadcast %c384_i32 : i32 to vector<1x1xi32>
    %21 = arith.addi %19, %20 : vector<1x1xi32>
    %22 = vector.broadcast %21 : vector<1x1xi32> to vector<1x512xi32>
    %23 = arith.cmpi eq, %1, %22 : vector<1x512xi32>
    %24 = arith.ori %18, %23 : vector<1x512xi1>
    %25 = arith.extui %24 : vector<1x512xi1> to vector<1x512xi32>
    %26 = arith.sitofp %25 : vector<1x512xi32> to vector<1x512xf32>
    %27 = arith.truncf %26 : vector<1x512xf32> to vector<1x512xbf16>
    %c0_1 = arith.constant 0 : index
    %c0_2 = arith.constant 0 : index
    %28 = vector.load %arg2[%c0_1, %c0_2] : memref<512x128xbf16, #tpu.memory_space<vmem>>, vector<512x128xbf16>
    %cst = arith.constant dense<0.000000e+00> : vector<1x128xf32>
    %29 = tpu.matmul %27, %28, %cst {dimension_numbers = #tpu.dot_dimension_numbers<[1], [0], [0], [1], [0, 0, 1, 1], [], []>} : vector<1x512xbf16>, vector<512x128xbf16>, vector<1x128xf32> -> vector<1x128xf32>
    %30 = arith.truncf %29 : vector<1x128xf32> to vector<1x128xbf16>
    %c0_3 = arith.constant 0 : index
    %c0_4 = arith.constant 0 : index
    %31 = vector.load %arg3[%c0_3, %c0_4] : memref<128x256xbf16, #tpu.memory_space<vmem>>, vector<128x256xbf16>
    %cst_5 = arith.constant dense<0.000000e+00> : vector<1x256xf32>
    %32 = tpu.matmul %30, %31, %cst_5 {dimension_numbers = #tpu.dot_dimension_numbers<[1], [0], [0], [1], [0, 0, 1, 1], [], []>} : vector<1x128xbf16>, vector<128x256xbf16>, vector<1x256xf32> -> vector<1x256xf32>
    %c0_6 = arith.constant 0 : index
    %c0_7 = arith.constant 0 : index
    %33 = vector.load %arg4[%c0_6, %c0_7] : memref<1x256xf32, #tpu.memory_space<vmem>>, vector<1x256xf32>
    %34 = arith.addf %32, %33 : vector<1x256xf32>
    %cst_8 = arith.constant 0.000000e+00 : f32
    %35 = vector.broadcast %cst_8 : f32 to vector<1x256xf32>
    %36 = arith.maximumf %34, %35 : vector<1x256xf32>
    %37 = arith.truncf %36 : vector<1x256xf32> to vector<1x256xbf16>
    %c0_9 = arith.constant 0 : index
    %c0_10 = arith.constant 0 : index
    %38 = vector.load %arg5[%c0_9, %c0_10] : memref<256x128xbf16, #tpu.memory_space<vmem>>, vector<256x128xbf16>
    %cst_11 = arith.constant dense<0.000000e+00> : vector<1x128xf32>
    %39 = tpu.matmul %37, %38, %cst_11 {dimension_numbers = #tpu.dot_dimension_numbers<[1], [0], [0], [1], [0, 0, 1, 1], [], []>} : vector<1x256xbf16>, vector<256x128xbf16>, vector<1x128xf32> -> vector<1x128xf32>
    %c0_12 = arith.constant 0 : index
    %c0_13 = arith.constant 0 : index
    %40 = vector.load %arg6[%c0_12, %c0_13] : memref<1x128xf32, #tpu.memory_space<vmem>>, vector<1x128xf32>
    %41 = arith.addf %39, %40 : vector<1x128xf32>
    %cst_14 = arith.constant dense<0xFF800000> : vector<1xf32>
    %42 = vector.multi_reduction <maximumf>, %41, %cst_14 [1] : vector<1x128xf32> to vector<1xf32>
    %43 = vector.shape_cast %42 : vector<1xf32> to vector<1x1xf32>
    %44 = vector.broadcast %43 : vector<1x1xf32> to vector<1x128xf32>
    %45 = arith.subf %41, %44 : vector<1x128xf32>
    %46 = math.exp %45 : vector<1x128xf32>
    %cst_15 = arith.constant dense<0.000000e+00> : vector<1xf32>
    %47 = vector.multi_reduction <add>, %46, %cst_15 [1] : vector<1x128xf32> to vector<1xf32>
    %48 = vector.shape_cast %47 : vector<1xf32> to vector<1x1xf32>
    %49 = math.log %48 : vector<1x1xf32>
    %50 = vector.broadcast %49 : vector<1x1xf32> to vector<1x128xf32>
    %51 = arith.subf %45, %50 : vector<1x128xf32>
    %c0_16 = arith.constant 0 : index
    %c0_17 = arith.constant 0 : index
    %52 = vector.load %arg7[%c0_16, %c0_17] : memref<1x128xf32, #tpu.memory_space<vmem>>, vector<1x128xf32>
    tpu.vector_store %arg7[%c0_16, %c0_17], %51 {strides = array<i32>} : memref<1x128xf32, #tpu.memory_space<vmem>>, vector<1x128xf32>,
    return
  }
  func.func @transform_0(%arg0: i32) -> (i32, i32) {
    %c0_i32 = arith.constant 0 : i32
    %c0_i32_0 = arith.constant 0 : i32
    return %arg0, %c0_i32 : i32, i32
  }
  func.func @transform_1(%arg0: i32) -> (i32, i32) {
    %c0_i32 = arith.constant 0 : i32
    %c0_i32_0 = arith.constant 0 : i32
    %c0_i32_1 = arith.constant 0 : i32
    return %c0_i32, %c0_i32_0 : i32, i32
  }
  func.func @transform_2(%arg0: i32) -> (i32, i32) {
    %c0_i32 = arith.constant 0 : i32
    %c0_i32_0 = arith.constant 0 : i32
    %c0_i32_1 = arith.constant 0 : i32
    return %c0_i32, %c0_i32_0 : i32, i32
  }
  func.func @transform_3(%arg0: i32) -> (i32, i32) {
    %c0_i32 = arith.constant 0 : i32
    %c0_i32_0 = arith.constant 0 : i32
    %c0_i32_1 = arith.constant 0 : i32
    return %c0_i32, %c0_i32_0 : i32, i32
  }
  func.func @transform_4(%arg0: i32) -> (i32, i32) {
    %c0_i32 = arith.constant 0 : i32
    %c0_i32_0 = arith.constant 0 : i32
    %c0_i32_1 = arith.constant 0 : i32
    return %c0_i32, %c0_i32_0 : i32, i32
  }
  func.func @transform_5(%arg0: i32) -> (i32, i32) {
    %c0_i32 = arith.constant 0 : i32
    %c0_i32_0 = arith.constant 0 : i32
    %c0_i32_1 = arith.constant 0 : i32
    return %c0_i32, %c0_i32_0 : i32, i32
  }
  func.func @transform_6(%arg0: i32) -> (i32, i32) {
    %c0_i32 = arith.constant 0 : i32
    %c0_i32_0 = arith.constant 0 : i32
    return %arg0, %c0_i32 : i32, i32
  }
}

</mosaic_0001>

<llo_original>
// kernel: tpu_custom_call.1
$region0: #{tpu_custom_call.1}
  #allocation0 [shape = 'u32[]', space=smem, size = 0x4, offset = 0x4, fixed_abs, tag = 'smem constant byte address 0x4 - core index']
  #allocation1 [shape = 'u32[144,128]{1,0:T(1,128)}', space=vmem, size = 0x12000, scoped, tag = 'internal scratch']
  %s0 = inlined_call_operand.hbm [shape: s32[1,4], index: 0, kind: input, shape index: {}]
  %s1 = inlined_call_operand.hbm [shape: bf16[512,128], index: 1, kind: input, shape index: {}]
  %s2 = inlined_call_operand.hbm [shape: bf16[128,256], index: 2, kind: input, shape index: {}]
  %s3 = inlined_call_operand.vmem [shape: f32[1,256], index: 3, kind: input, shape index: {}]
  %s4 = inlined_call_operand.hbm [shape: bf16[256,128], index: 4, kind: input, shape index: {}]
  %s5 = inlined_call_operand.vmem [shape: f32[1,128], index: 5, kind: input, shape index: {}]
  %s6 = inlined_call_operand.hbm [shape: f32[1,128], index: 6, kind: output, shape index: {}]
  %s7 = sld [smem:[#allocation0]]
  $region50: #{tpu_custom_call.1} parent=0
    _
  %s9 = ssub.s32 1, %s7
  %s10 = scalar_select 0, %s9, %s7
  $region1: #{tpu_custom_call.1} parent=0
    #allocation2 [shape = 'u8[512]{0}', space=vmem, size = 0x400, scoped, tag = 'input window, operand 0, single buffered']
    #allocation3 [shape = 's32[1]{0}', space=sflag, size = 0x4, scoped, tag = 'scoped memory for tpu_custom_call.1']
    #allocation4 [shape = 's32[1]{0}', space=sflag, size = 0x4, scoped, tag = 'scoped memory for tpu_custom_call.1']
    #allocation5 [shape = 'u8[131072]{0}', space=vmem, size = 0x20000, scoped, tag = 'input window, operand 1, single buffered']
    #allocation6 [shape = 's32[1]{0}', space=sflag, size = 0x4, scoped, tag = 'scoped memory for tpu_custom_call.1']
    #allocation7 [shape = 'u8[65536]{0}', space=vmem, size = 0x10000, scoped, tag = 'input window, operand 2, single buffered']
    #allocation8 [shape = 'u8[65536]{0}', space=vmem, size = 0x10000, scoped, tag = 'input window, operand 4, single buffered']
    #allocation9 [shape = 's32[1]{0}', space=sflag, size = 0x4, scoped, tag = 'scoped memory for tpu_custom_call.1']
    #allocation10 [shape = 'u8[512]{0}', space=vmem, size = 0x400, scoped, tag = 'output window, operand 0, single buffered']
    %11 = vsyncpa [#allocation3], 0
    %12 = vsyncpa [#allocation6], 0
    %13 = vsyncpa [#allocation9], 0
    %14 = vsyncpa [#allocation4], 0
    // Predicated region
    $region2: #{tpu_custom_call.1} parent=1 // pred_check
      _
    $region3: #{tpu_custom_call.1} parent=1 // pred_check_branch
      %16 = sbr.rel (0) target = $region5
    $region4: #{tpu_custom_call.1} parent=1 // pred_region
      %s18 = ssub.s32 16, 16
      %19 = vsyncadd [#allocation3], %s18
      %s21 = sshll.u32 [#allocation2], 4
      %s22 = int_to_ptr.vmem [resolvable:$true] %s21
      %24 = dma.hbm_to_vmem [thread:$0]  %s0, 16, %s22, [#allocation3]
    $region5: #{tpu_custom_call.1} parent=1 // pred_fallthru
      _
    // Predicated region
    $region6: #{tpu_custom_call.1} parent=1 // pred_check
      _
    $region7: #{tpu_custom_call.1} parent=1 // pred_check_branch
      %26 = sbr.rel (0) target = $region9
    $region8: #{tpu_custom_call.1} parent=1 // pred_region
      %s28 = ssub.s32 4096, 4096
      %29 = vsyncadd [#allocation6], %s28
      %s30 = sshll.u32 [#allocation5], 4
      %s31 = int_to_ptr.vmem [resolvable:$true] %s30
      %36 = dma.hbm_to_vmem [thread:$0]  %s1, 4096, %s31, [#allocation6], 64, 64, 4
    $region9: #{tpu_custom_call.1} parent=1 // pred_fallthru
      _
    // Predicated region
    $region10: #{tpu_custom_call.1} parent=1 // pred_check
      _
    $region11: #{tpu_custom_call.1} parent=1 // pred_check_branch
      %38 = sbr.rel (0) target = $region13
    $region12: #{tpu_custom_call.1} parent=1 // pred_region
      %s40 = ssub.s32 2048, 2048
      %41 = vsyncadd [#allocation6], %s40
      %s42 = sshll.u32 [#allocation7], 4
      %s43 = int_to_ptr.vmem [resolvable:$true] %s42
      %48 = dma.hbm_to_vmem [thread:$0]  %s2, 2048, %s43, [#allocation6], 128, 128, 8
    $region13: #{tpu_custom_call.1} parent=1 // pred_fallthru
      _
    // Predicated region
    $region14: #{tpu_custom_call.1} parent=1 // pred_check
      _
    $region15: #{tpu_custom_call.1} parent=1 // pred_check_branch
      %50 = sbr.rel (0) target = $region17
    $region16: #{tpu_custom_call.1} parent=1 // pred_region
      _
    $region17: #{tpu_custom_call.1} parent=1 // pred_fallthru
      _
    // Predicated region
    $region18: #{tpu_custom_call.1} parent=1 // pred_check
      _
    $region19: #{tpu_custom_call.1} parent=1 // pred_check_branch
      %52 = sbr.rel (0) target = $region21
    $region20: #{tpu_custom_call.1} parent=1 // pred_region
      %s54 = ssub.s32 2048, 2048
      %55 = vsyncadd [#allocation9], %s54
      %s56 = sshll.u32 [#allocation8], 4
      %s57 = int_to_ptr.vmem [resolvable:$true] %s56
      %62 = dma.hbm_to_vmem [thread:$0]  %s4, 2048, %s57, [#allocation9], 64, 64, 4
    $region21: #{tpu_custom_call.1} parent=1 // pred_fallthru
      _
    // Predicated region
    $region22: #{tpu_custom_call.1} parent=1 // pred_check
      _
    $region23: #{tpu_custom_call.1} parent=1 // pred_check_branch
      %64 = sbr.rel (0) target = $region25
    $region24: #{tpu_custom_call.1} parent=1 // pred_region
      _
    $region25: #{tpu_custom_call.1} parent=1 // pred_fallthru
      _
    // Predicated region
    $region26: #{tpu_custom_call.1} parent=1 // pred_check
      _
    $region27: #{tpu_custom_call.1} parent=1 // pred_check_branch
      %66 = sbr.rel (0) target = $region29
    $region28: #{tpu_custom_call.1} parent=1 // pred_region
      %67 = dma.done [#allocation3], 16
    $region29: #{tpu_custom_call.1} parent=1 // pred_fallthru
      _
    // Predicated region
    $region30: #{tpu_custom_call.1} parent=1 // pred_check
      _
    $region31: #{tpu_custom_call.1} parent=1 // pred_check_branch
      %69 = sbr.rel (0) target = $region33
    $region32: #{tpu_custom_call.1} parent=1 // pred_region
      %70 = dma.done [#allocation6], 4096
    $region33: #{tpu_custom_call.1} parent=1 // pred_fallthru
      _
    // Predicated region
    $region34: #{tpu_custom_call.1} parent=1 // pred_check
      _
    $region35: #{tpu_custom_call.1} parent=1 // pred_check_branch
      %72 = sbr.rel (0) target = $region37
    $region36: #{tpu_custom_call.1} parent=1 // pred_region
      %73 = dma.done [#allocation6], 2048
    $region37: #{tpu_custom_call.1} parent=1 // pred_fallthru
      _
    // Predicated region
    $region38: #{tpu_custom_call.1} parent=1 // pred_check
      _
    $region39: #{tpu_custom_call.1} parent=1 // pred_check_branch
      %75 = sbr.rel (0) target = $region41
    $region40: #{tpu_custom_call.1} parent=1 // pred_region
      %76 = dma.done [#allocation9], 2048
    $region41: #{tpu_custom_call.1} parent=1 // pred_fallthru
      _
    %v78 = vld [vmem:[#allocation2] sm:$0x1]
    %v79 = vlaneseq
    %v80 = vand.u32 %v79, 127
    %v81 = vadd.s32 %v80, 128
    %v82 = vadd.s32 %v80, 256
    %v83 = vadd.s32 %v80, 384
    %84 = vset.pattern.permute.xlu0 0
    %85 = vperm.xlu0 %84, %v78
    %v86 = vpop.permute.xlu0 %85
    %v87 = vlaneseq
    %v88 = vshrl.u32 %v87, 7
    %v89 = vsub.s32 0, %v88
    %v90 = vrot.slane %v86, %v89
    %vm91 = vcmp.eq.s32.totalorder %v80, %v90
    %vm92 = vcmp.eq.s32.totalorder %v81, %v90
    %vm93 = vcmp.eq.s32.totalorder %v82, %v90
    %vm94 = vcmp.eq.s32.totalorder %v83, %v90
    %v95 = vadd.s32 %v78, 128
    %96 = vset.pattern.permute.xlu0 1
    %97 = vperm.xlu0 %96, %v95
    %v98 = vpop.permute.xlu0 %97
    %v99 = vlaneseq
    %v100 = vshrl.u32 %v99, 7
    %v101 = vsub.s32 0, %v100
    %v102 = vrot.slane %v98, %v101
    %vm103 = vcmp.eq.s32.totalorder %v80, %v102
    %vm104 = vcmp.eq.s32.totalorder %v81, %v102
    %vm105 = vcmp.eq.s32.totalorder %v82, %v102
    %vm106 = vcmp.eq.s32.totalorder %v83, %v102
    %vm107 = vmor %vm91, %vm103
    %vm108 = vmor %vm92, %vm104
    %vm109 = vmor %vm93, %vm105
    %vm110 = vmor %vm94, %vm106
    %v111 = vadd.s32 %v78, 256
    %112 = vset.pattern.permute.xlu0 2
    %113 = vperm.xlu0 %112, %v111
    %v114 = vpop.permute.xlu0 %113
    %v115 = vlaneseq
    %v116 = vshrl.u32 %v115, 7
    %v117 = vsub.s32 0, %v116
    %v118 = vrot.slane %v114, %v117
    %vm119 = vcmp.eq.s32.totalorder %v80, %v118
    %vm120 = vcmp.eq.s32.totalorder %v81, %v118
    %vm121 = vcmp.eq.s32.totalorder %v82, %v118
    %vm122 = vcmp.eq.s32.totalorder %v83, %v118
    %vm123 = vmor %vm107, %vm119
    %vm124 = vmor %vm108, %vm120
    %vm125 = vmor %vm109, %vm121
    %vm126 = vmor %vm110, %vm122
    %v127 = vadd.s32 %v78, 384
    %128 = vset.pattern.permute.xlu0 3
    %129 = vperm.xlu0 %128, %v127
    %v130 = vpop.permute.xlu0 %129
    %v131 = vlaneseq
    %v132 = vshrl.u32 %v131, 7
    %v133 = vsub.s32 0, %v132
    %v134 = vrot.slane %v130, %v133
    %vm135 = vcmp.eq.s32.totalorder %v80, %v134
    %vm136 = vcmp.eq.s32.totalorder %v81, %v134
    %vm137 = vcmp.eq.s32.totalorder %v82, %v134
    %vm138 = vcmp.eq.s32.totalorder %v83, %v134
    %vm139 = vmor %vm123, %vm135
    %vm140 = vmor %vm124, %vm136
    %vm141 = vmor %vm125, %vm137
    %vm142 = vmor %vm126, %vm138
    %v143 = vsel %vm139, 1, 0
    %v144 = vsel %vm140, 1, 0
    %v145 = vsel %vm141, 1, 0
    %v146 = vsel %vm142, 1, 0
    %v147 = vcvt.s32.f32 %v143
    %v148 = vcvt.s32.f32 %v144
    %v149 = vcvt.s32.f32 %v145
    %v150 = vcvt.s32.f32 %v146
    %v151 = vpack.c.bf16 %v147, %v147
    %v152 = vpack.c.bf16 %v148, %v148
    %v153 = vpack.c.bf16 %v149, %v149
    %v154 = vpack.c.bf16 %v150, %v150
    %v155 = vld [vmem:[#allocation5] sm:$0xf]
    %v156 = vld [vmem:[#allocation5 + $0x4] sm:$0xf]
    %v157 = vld [vmem:[#allocation5 + $0x8] sm:$0xf]
    %v158 = vld [vmem:[#allocation5 + $0xc] sm:$0xf]
    %v159 = vld [vmem:[#allocation5 + $0x10] sm:$0xf]
    %v160 = vld [vmem:[#allocation5 + $0x14] sm:$0xf]
    %v161 = vld [vmem:[#allocation5 + $0x18] sm:$0xf]
    %v162 = vld [vmem:[#allocation5 + $0x1c] sm:$0xf]
    %v163 = vld [vmem:[#allocation5 + $0x20] sm:$0xf]
    %v164 = vld [vmem:[#allocation5 + $0x24] sm:$0xf]
    %v165 = vld [vmem:[#allocation5 + $0x28] sm:$0xf]
    %v166 = vld [vmem:[#allocation5 + $0x2c] sm:$0xf]
    %v167 = vld [vmem:[#allocation5 + $0x30] sm:$0xf]
    %v168 = vld [vmem:[#allocation5 + $0x34] sm:$0xf]
    %v169 = vld [vmem:[#allocation5 + $0x38] sm:$0xf]
    %v170 = vld [vmem:[#allocation5 + $0x3c] sm:$0xf]
    %v171 = vld [vmem:[#allocation5 + $0x40] sm:$0xf]
    %v172 = vld [vmem:[#allocation5 + $0x44] sm:$0xf]
    %v173 = vld [vmem:[#allocation5 + $0x48] sm:$0xf]
    %v174 = vld [vmem:[#allocation5 + $0x4c] sm:$0xf]
    %v175 = vld [vmem:[#allocation5 + $0x50] sm:$0xf]
    %v176 = vld [vmem:[#allocation5 + $0x54] sm:$0xf]
    %v177 = vld [vmem:[#allocation5 + $0x58] sm:$0xf]
    %v178 = vld [vmem:[#allocation5 + $0x5c] sm:$0xf]
    %v179 = vld [vmem:[#allocation5 + $0x60] sm:$0xf]
    %v180 = vld [vmem:[#allocation5 + $0x64] sm:$0xf]
    %v181 = vld [vmem:[#allocation5 + $0x68] sm:$0xf]
    %v182 = vld [vmem:[#allocation5 + $0x6c] sm:$0xf]
    %v183 = vld [vmem:[#allocation5 + $0x70] sm:$0xf]
    %v184 = vld [vmem:[#allocation5 + $0x74] sm:$0xf]
    %v185 = vld [vmem:[#allocation5 + $0x78] sm:$0xf]
    %v186 = vld [vmem:[#allocation5 + $0x7c] sm:$0xf]
    %v187 = vld [vmem:[#allocation5 + $0x80] sm:$0xf]
    %v188 = vld [vmem:[#allocation5 + $0x84] sm:$0xf]
    %v189 = vld [vmem:[#allocation5 + $0x88] sm:$0xf]
    %v190 = vld [vmem:[#allocation5 + $0x8c] sm:$0xf]
    %v191 = vld [vmem:[#allocation5 + $0x90] sm:$0xf]
    %v192 = vld [vmem:[#allocation5 + $0x94] sm:$0xf]
    %v193 = vld [vmem:[#allocation5 + $0x98] sm:$0xf]
    %v194 = vld [vmem:[#allocation5 + $0x9c] sm:$0xf]
    %v195 = vld [vmem:[#allocation5 + $0xa0] sm:$0xf]
    %v196 = vld [vmem:[#allocation5 + $0xa4] sm:$0xf]
    %v197 = vld [vmem:[#allocation5 + $0xa8] sm:$0xf]
    %v198 = vld [vmem:[#allocation5 + $0xac] sm:$0xf]
    %v199 = vld [vmem:[#allocation5 + $0xb0] sm:$0xf]
    %v200 = vld [vmem:[#allocation5 + $0xb4] sm:$0xf]
    %v201 = vld [vmem:[#allocation5 + $0xb8] sm:$0xf]
    %v202 = vld [vmem:[#allocation5 + $0xbc] sm:$0xf]
    %v203 = vld [vmem:[#allocation5 + $0xc0] sm:$0xf]
    %v204 = vld [vmem:[#allocation5 + $0xc4] sm:$0xf]
    %v205 = vld [vmem:[#allocation5 + $0xc8] sm:$0xf]
    %v206 = vld [vmem:[#allocation5 + $0xcc] sm:$0xf]
    %v207 = vld [vmem:[#allocation5 + $0xd0] sm:$0xf]
    %v208 = vld [vmem:[#allocation5 + $0xd4] sm:$0xf]
    %v209 = vld [vmem:[#allocation5 + $0xd8] sm:$0xf]
    %v210 = vld [vmem:[#allocation5 + $0xdc] sm:$0xf]
    %v211 = vld [vmem:[#allocation5 + $0xe0] sm:$0xf]
    %v212 = vld [vmem:[#allocation5 + $0xe4] sm:$0xf]
    %v213 = vld [vmem:[#allocation5 + $0xe8] sm:$0xf]
    %v214 = vld [vmem:[#allocation5 + $0xec] sm:$0xf]
    %v215 = vld [vmem:[#allocation5 + $0xf0] sm:$0xf]
    %v216 = vld [vmem:[#allocation5 + $0xf4] sm:$0xf]
    %v217 = vld [vmem:[#allocation5 + $0xf8] sm:$0xf]
    %v218 = vld [vmem:[#allocation5 + $0xfc] sm:$0xf]
    %v283 = vunpack.c.l.b16 %v155
    %v284 = vunpack.c.l.b16 %v156
    %v285 = vunpack.c.l.b16 %v157
    %v286 = vunpack.c.l.b16 %v158
    %v287 = vunpack.c.l.b16 %v159
    %v288 = vunpack.c.l.b16 %v160
    %v289 = vunpack.c.l.b16 %v161
    %v290 = vunpack.c.l.b16 %v162
    %v291 = vunpack.c.l.b16 %v163
    %v292 = vunpack.c.l.b16 %v164
    %v293 = vunpack.c.l.b16 %v165
    %v294 = vunpack.c.l.b16 %v166
    %v295 = vunpack.c.l.b16 %v167
    %v296 = vunpack.c.l.b16 %v168
    %v297 = vunpack.c.l.b16 %v169
    %v298 = vunpack.c.l.b16 %v170
    %v299 = vunpack.c.l.b16 %v171
    %v300 = vunpack.c.l.b16 %v172
    %v301 = vunpack.c.l.b16 %v173
    %v302 = vunpack.c.l.b16 %v174
    %v303 = vunpack.c.l.b16 %v175
    %v304 = vunpack.c.l.b16 %v176
    %v305 = vunpack.c.l.b16 %v177
    %v306 = vunpack.c.l.b16 %v178
    %v307 = vunpack.c.l.b16 %v179
    %v308 = vunpack.c.l.b16 %v180
    %v309 = vunpack.c.l.b16 %v181
    %v310 = vunpack.c.l.b16 %v182
    %v311 = vunpack.c.l.b16 %v183
    %v312 = vunpack.c.l.b16 %v184
    %v313 = vunpack.c.l.b16 %v185
    %v314 = vunpack.c.l.b16 %v186
    %v315 = vunpack.c.l.b16 %v187
    %v316 = vunpack.c.l.b16 %v188
    %v317 = vunpack.c.l.b16 %v189
    %v318 = vunpack.c.l.b16 %v190
    %v319 = vunpack.c.l.b16 %v191
    %v320 = vunpack.c.l.b16 %v192
    %v321 = vunpack.c.l.b16 %v193
    %v322 = vunpack.c.l.b16 %v194
    %v323 = vunpack.c.l.b16 %v195
    %v324 = vunpack.c.l.b16 %v196
    %v325 = vunpack.c.l.b16 %v197
    %v326 = vunpack.c.l.b16 %v198
    %v327 = vunpack.c.l.b16 %v199
    %v328 = vunpack.c.l.b16 %v200
    %v329 = vunpack.c.l.b16 %v201
    %v330 = vunpack.c.l.b16 %v202
    %v331 = vunpack.c.l.b16 %v203
    %v332 = vunpack.c.l.b16 %v204
    %v333 = vunpack.c.l.b16 %v205
    %v334 = vunpack.c.l.b16 %v206
    %v335 = vunpack.c.l.b16 %v207
    %v336 = vunpack.c.l.b16 %v208
    %v337 = vunpack.c.l.b16 %v209
    %v338 = vunpack.c.l.b16 %v210
    %v339 = vunpack.c.l.b16 %v211
    %v340 = vunpack.c.l.b16 %v212
    %v341 = vunpack.c.l.b16 %v213
    %v342 = vunpack.c.l.b16 %v214
    %v343 = vunpack.c.l.b16 %v215
    %v344 = vunpack.c.l.b16 %v216
    %v345 = vunpack.c.l.b16 %v217
    %v346 = vunpack.c.l.b16 %v218
    %v347 = vpack.c.b16 %v284, %v283
    %v348 = vpack.c.b16 %v286, %v285
    %v349 = vpack.c.b16 %v288, %v287
    %v350 = vpack.c.b16 %v290, %v289
    %v351 = vpack.c.b16 %v292, %v291
    %v352 = vpack.c.b16 %v294, %v293
    %v353 = vpack.c.b16 %v296, %v295
    %v354 = vpack.c.b16 %v298, %v297
    %v355 = vpack.c.b16 %v300, %v299
    %v356 = vpack.c.b16 %v302, %v301
    %v357 = vpack.c.b16 %v304, %v303
    %v358 = vpack.c.b16 %v306, %v305
    %v359 = vpack.c.b16 %v308, %v307
    %v360 = vpack.c.b16 %v310, %v309
    %v361 = vpack.c.b16 %v312, %v311
    %v362 = vpack.c.b16 %v314, %v313
    %v363 = vpack.c.b16 %v316, %v315
    %v364 = vpack.c.b16 %v318, %v317
    %v365 = vpack.c.b16 %v320, %v319
    %v366 = vpack.c.b16 %v322, %v321
    %v367 = vpack.c.b16 %v324, %v323
    %v368 = vpack.c.b16 %v326, %v325
    %v369 = vpack.c.b16 %v328, %v327
    %v370 = vpack.c.b16 %v330, %v329
    %v371 = vpack.c.b16 %v332, %v331
    %v372 = vpack.c.b16 %v334, %v333
    %v373 = vpack.c.b16 %v336, %v335
    %v374 = vpack.c.b16 %v338, %v337
    %v375 = vpack.c.b16 %v340, %v339
    %v376 = vpack.c.b16 %v342, %v341
    %v377 = vpack.c.b16 %v344, %v343
    %v378 = vpack.c.b16 %v346, %v345
    %411 = vmatprep.subr.bf16.mxu0 0
    %412 = vmatpush1.bf16.msra.mxu0 %v347
    %413 = vmatprep.subr.bf16.mxu0 0
    %414 = vmatpush1.bf16.msra.mxu0 %v348
    %415 = vmatprep.subr.bf16.mxu0 0
    %416 = vmatpush1.bf16.msra.mxu0 %v349
    %417 = vmatprep.subr.bf16.mxu0 0
    %418 = vmatpush1.bf16.msra.mxu0 %v350
    %419 = vmatprep.subr.bf16.mxu0 0
    %420 = vmatpush1.bf16.msra.mxu0 %v351
    %421 = vmatprep.subr.bf16.mxu0 0
    %422 = vmatpush1.bf16.msra.mxu0 %v352
    %423 = vmatprep.subr.bf16.mxu0 0
    %424 = vmatpush1.bf16.msra.mxu0 %v353
    %425 = vmatprep.subr.bf16.mxu0 0
    %426 = vmatpush1.bf16.msra.mxu0 %v354
    %427 = vmatprep.subr.bf16.mxu0 0
    %428 = vmatpush1.bf16.msra.mxu0 %v355
    %429 = vmatprep.subr.bf16.mxu0 0
    %430 = vmatpush1.bf16.msra.mxu0 %v356
    %431 = vmatprep.subr.bf16.mxu0 0
    %432 = vmatpush1.bf16.msra.mxu0 %v357
    %433 = vmatprep.subr.bf16.mxu0 0
    %434 = vmatpush1.bf16.msra.mxu0 %v358
    %435 = vmatprep.subr.bf16.mxu0 0
    %436 = vmatpush1.bf16.msra.mxu0 %v359
    %437 = vmatprep.subr.bf16.mxu0 0
    %438 = vmatpush1.bf16.msra.mxu0 %v360
    %439 = vmatprep.subr.bf16.mxu0 0
    %440 = vmatpush1.bf16.msra.mxu0 %v361
    %441 = vmatprep.subr.bf16.mxu0 0
    %442 = vmatpush1.bf16.msra.mxu0 %v362
    %443 = vmatprep.mubr.bf16.mxu0 %v152
    %444 = vmatmul.mubr.bf16.gmra.mrb[0].mxu0 %v151
    %v445 = vpop.f32.mrb[0].mxu0
    %v446 = vadd.f32 0.0, %v445
    %v447 = vpop.f32.mrb[0].mxu0
    %v448 = vpop.f32.mrb[0].mxu0
    %v449 = vpop.f32.mrb[0].mxu0
    %450 = vdwg.mxu0
    %451 = vmatprep.subr.bf16.mxu0 0
    %452 = vmatpush1.bf16.msra.mxu0 %v363
    %453 = vmatprep.subr.bf16.mxu0 0
    %454 = vmatpush1.bf16.msra.mxu0 %v364
    %455 = vmatprep.subr.bf16.mxu0 0
    %456 = vmatpush1.bf16.msra.mxu0 %v365
    %457 = vmatprep.subr.bf16.mxu0 0
    %458 = vmatpush1.bf16.msra.mxu0 %v366
    %459 = vmatprep.subr.bf16.mxu0 0
    %460 = vmatpush1.bf16.msra.mxu0 %v367
    %461 = vmatprep.subr.bf16.mxu0 0
    %462 = vmatpush1.bf16.msra.mxu0 %v368
    %463 = vmatprep.subr.bf16.mxu0 0
    %464 = vmatpush1.bf16.msra.mxu0 %v369
    %465 = vmatprep.subr.bf16.mxu0 0
    %466 = vmatpush1.bf16.msra.mxu0 %v370
    %467 = vmatprep.subr.bf16.mxu0 0
    %468 = vmatpush1.bf16.msra.mxu0 %v371
    %469 = vmatprep.subr.bf16.mxu0 0
    %470 = vmatpush1.bf16.msra.mxu0 %v372
    %471 = vmatprep.subr.bf16.mxu0 0
    %472 = vmatpush1.bf16.msra.mxu0 %v373
    %473 = vmatprep.subr.bf16.mxu0 0
    %474 = vmatpush1.bf16.msra.mxu0 %v374
    %475 = vmatprep.subr.bf16.mxu0 0
    %476 = vmatpush1.bf16.msra.mxu0 %v375
    %477 = vmatprep.subr.bf16.mxu0 0
    %478 = vmatpush1.bf16.msra.mxu0 %v376
    %479 = vmatprep.subr.bf16.mxu0 0
    %480 = vmatpush1.bf16.msra.mxu0 %v377
    %481 = vmatprep.subr.bf16.mxu0 0
    %482 = vmatpush1.bf16.msra.mxu0 %v378
    %483 = vmatprep.mubr.bf16.mxu0 %v154
    %484 = vmatmul.mubr.bf16.gmra.mrb[0].mxu0 %v153
    %v485 = vpop.f32.mrb[0].mxu0
    %v486 = vadd.f32 %v446, %v485
    %v487 = vpop.f32.mrb[0].mxu0
    %v488 = vpop.f32.mrb[0].mxu0
    %v489 = vpop.f32.mrb[0].mxu0
    %490 = vdwg.mxu0
    %v491 = vpack.c.bf16 %v486, %v486
    %v492 = vld [vmem:[#allocation7] sm:$0xff]
    %v493 = vld [vmem:[#allocation7 + $0x8] sm:$0xff]
    %v494 = vld [vmem:[#allocation7 + $0x10] sm:$0xff]
    %v495 = vld [vmem:[#allocation7 + $0x18] sm:$0xff]
    %v496 = vld [vmem:[#allocation7 + $0x20] sm:$0xff]
    %v497 = vld [vmem:[#allocation7 + $0x28] sm:$0xff]
    %v498 = vld [vmem:[#allocation7 + $0x30] sm:$0xff]
    %v499 = vld [vmem:[#allocation7 + $0x38] sm:$0xff]
    %v500 = vld [vmem:[#allocation7 + $0x40] sm:$0xff]
    %v501 = vld [vmem:[#allocation7 + $0x48] sm:$0xff]
    %v502 = vld [vmem:[#allocation7 + $0x50] sm:$0xff]
    %v503 = vld [vmem:[#allocation7 + $0x58] sm:$0xff]
    %v504 = vld [vmem:[#allocation7 + $0x60] sm:$0xff]
    %v505 = vld [vmem:[#allocation7 + $0x68] sm:$0xff]
    %v506 = vld [vmem:[#allocation7 + $0x70] sm:$0xff]
    %v507 = vld [vmem:[#allocation7 + $0x78] sm:$0xff]
    %v508 = vld [vmem:[%s3] sm:$0x3]
    %v525 = vunpack.c.l.b16 %v492
    %v526 = vunpack.c.h.b16 %v492
    %v527 = vunpack.c.l.b16 %v493
    %v528 = vunpack.c.h.b16 %v493
    %v529 = vunpack.c.l.b16 %v494
    %v530 = vunpack.c.h.b16 %v494
    %v531 = vunpack.c.l.b16 %v495
    %v532 = vunpack.c.h.b16 %v495
    %v533 = vunpack.c.l.b16 %v496
    %v534 = vunpack.c.h.b16 %v496
    %v535 = vunpack.c.l.b16 %v497
    %v536 = vunpack.c.h.b16 %v497
    %v537 = vunpack.c.l.b16 %v498
    %v538 = vunpack.c.h.b16 %v498
    %v539 = vunpack.c.l.b16 %v499
    %v540 = vunpack.c.h.b16 %v499
    %v541 = vunpack.c.l.b16 %v500
    %v542 = vunpack.c.h.b16 %v500
    %v543 = vunpack.c.l.b16 %v501
    %v544 = vunpack.c.h.b16 %v501
    %v545 = vunpack.c.l.b16 %v502
    %v546 = vunpack.c.h.b16 %v502
    %v547 = vunpack.c.l.b16 %v503
    %v548 = vunpack.c.h.b16 %v503
    %v549 = vunpack.c.l.b16 %v504
    %v550 = vunpack.c.h.b16 %v504
    %v551 = vunpack.c.l.b16 %v505
    %v552 = vunpack.c.h.b16 %v505
    %v553 = vunpack.c.l.b16 %v506
    %v554 = vunpack.c.h.b16 %v506
    %v555 = vunpack.c.l.b16 %v507
    %v556 = vunpack.c.h.b16 %v507
    %v557 = vpack.c.b16 %v527, %v525
    %v558 = vpack.c.b16 %v528, %v526
    %v559 = vpack.c.b16 %v531, %v529
    %v560 = vpack.c.b16 %v532, %v530
    %v561 = vpack.c.b16 %v535, %v533
    %v562 = vpack.c.b16 %v536, %v534
    %v563 = vpack.c.b16 %v539, %v537
    %v564 = vpack.c.b16 %v540, %v538
    %v565 = vpack.c.b16 %v543, %v541
    %v566 = vpack.c.b16 %v544, %v542
    %v567 = vpack.c.b16 %v547, %v545
    %v568 = vpack.c.b16 %v548, %v546
    %v569 = vpack.c.b16 %v551, %v549
    %v570 = vpack.c.b16 %v552, %v550
    %v571 = vpack.c.b16 %v555, %v553
    %v572 = vpack.c.b16 %v556, %v554
    %v590 = vlaneseq
    %v591 = vshrl.u32 %v590, 7
    %v592 = vsub.s32 0, %v591
    %v593 = vrot.slane %v508, %v592
    %v594 = vlaneseq
    %v595 = vshrl.u32 %v594, 7
    %v596 = vsub.s32 1, %v595
    %v597 = vrot.slane %v508, %v596
    %600 = vmatprep.subr.bf16.mxu0 %v558
    %601 = vmatpush1.bf16.msra.mxu0 %v557
    %602 = vmatprep.subr.bf16.mxu0 %v560
    %603 = vmatpush1.bf16.msra.mxu0 %v559
    %604 = vmatprep.subr.bf16.mxu0 %v562
    %605 = vmatpush1.bf16.msra.mxu0 %v561
    %606 = vmatprep.subr.bf16.mxu0 %v564
    %607 = vmatpush1.bf16.msra.mxu0 %v563
    %608 = vmatprep.subr.bf16.mxu0 %v566
    %609 = vmatpush1.bf16.msra.mxu0 %v565
    %610 = vmatprep.subr.bf16.mxu0 %v568
    %611 = vmatpush1.bf16.msra.mxu0 %v567
    %612 = vmatprep.subr.bf16.mxu0 %v570
    %613 = vmatpush1.bf16.msra.mxu0 %v569
    %614 = vmatprep.subr.bf16.mxu0 %v572
    %615 = vmatpush1.bf16.msra.mxu0 %v571
    %616 = vmatprep.subr.bf16.mxu0 0
    %617 = vmatpush1.bf16.msra.mxu0 0
    %618 = vmatprep.subr.bf16.mxu0 0
    %619 = vmatpush1.bf16.msra.mxu0 0
    %620 = vmatprep.subr.bf16.mxu0 0
    %621 = vmatpush1.bf16.msra.mxu0 0
    %622 = vmatprep.subr.bf16.mxu0 0
    %623 = vmatpush1.bf16.msra.mxu0 0
    %624 = vmatprep.subr.bf16.mxu0 0
    %625 = vmatpush1.bf16.msra.mxu0 0
    %626 = vmatprep.subr.bf16.mxu0 0
    %627 = vmatpush1.bf16.msra.mxu0 0
    %628 = vmatprep.subr.bf16.mxu0 0
    %629 = vmatpush1.bf16.msra.mxu0 0
    %630 = vmatprep.subr.bf16.mxu0 0
    %631 = vmatpush1.bf16.msra.mxu0 0
    %632 = vmatprep.mubr.bf16.mxu0 0
    %633 = vmatmul.mubr.bf16.gmra.mrb[0].mxu0 %v491
    %v634 = vpop.f32.mrb[0].mxu0
    %v635 = vadd.f32 %v593, %v634
    %v636 = vpop.f32.mrb[0].mxu0
    %v637 = vadd.f32 %v597, %v636
    %v638 = vpop.f32.mrb[0].mxu0
    %v639 = vpop.f32.mrb[0].mxu0
    %640 = vdwg.mxu0
    %v641 = vmax.f32 %v635, 0.0
    %v642 = vmax.f32 %v637, 0.0
    %v643 = vpack.c.bf16 %v641, %v641
    %v644 = vpack.c.bf16 %v642, %v642
    %v645 = vld [vmem:[#allocation8] sm:$0xf]
    %v646 = vld [vmem:[#allocation8 + $0x4] sm:$0xf]
    %v647 = vld [vmem:[#allocation8 + $0x8] sm:$0xf]
    %v648 = vld [vmem:[#allocation8 + $0xc] sm:$0xf]
    %v649 = vld [vmem:[#allocation8 + $0x10] sm:$0xf]
    %v650 = vld [vmem:[#allocation8 + $0x14] sm:$0xf]
    %v651 = vld [vmem:[#allocation8 + $0x18] sm:$0xf]
    %v652 = vld [vmem:[#allocation8 + $0x1c] sm:$0xf]
    %v653 = vld [vmem:[#allocation8 + $0x20] sm:$0xf]
    %v654 = vld [vmem:[#allocation8 + $0x24] sm:$0xf]
    %v655 = vld [vmem:[#allocation8 + $0x28] sm:$0xf]
    %v656 = vld [vmem:[#allocation8 + $0x2c] sm:$0xf]
    %v657 = vld [vmem:[#allocation8 + $0x30] sm:$0xf]
    %v658 = vld [vmem:[#allocation8 + $0x34] sm:$0xf]
    %v659 = vld [vmem:[#allocation8 + $0x38] sm:$0xf]
    %v660 = vld [vmem:[#allocation8 + $0x3c] sm:$0xf]
    %v661 = vld [vmem:[#allocation8 + $0x40] sm:$0xf]
    %v662 = vld [vmem:[#allocation8 + $0x44] sm:$0xf]
    %v663 = vld [vmem:[#allocation8 + $0x48] sm:$0xf]
    %v664 = vld [vmem:[#allocation8 + $0x4c] sm:$0xf]
    %v665 = vld [vmem:[#allocation8 + $0x50] sm:$0xf]
    %v666 = vld [vmem:[#allocation8 + $0x54] sm:$0xf]
    %v667 = vld [vmem:[#allocation8 + $0x58] sm:$0xf]
    %v668 = vld [vmem:[#allocation8 + $0x5c] sm:$0xf]
    %v669 = vld [vmem:[#allocation8 + $0x60] sm:$0xf]
    %v670 = vld [vmem:[#allocation8 + $0x64] sm:$0xf]
    %v671 = vld [vmem:[#allocation8 + $0x68] sm:$0xf]
    %v672 = vld [vmem:[#allocation8 + $0x6c] sm:$0xf]
    %v673 = vld [vmem:[#allocation8 + $0x70] sm:$0xf]
    %v674 = vld [vmem:[#allocation8 + $0x74] sm:$0xf]
    %v675 = vld [vmem:[#allocation8 + $0x78] sm:$0xf]
    %v676 = vld [vmem:[#allocation8 + $0x7c] sm:$0xf]
    %v677 = vld [vmem:[%s5] sm:$0x1]
    %v710 = vunpack.c.l.b16 %v645
    %v711 = vunpack.c.l.b16 %v646
    %v712 = vunpack.c.l.b16 %v647
    %v713 = vunpack.c.l.b16 %v648
    %v714 = vunpack.c.l.b16 %v649
    %v715 = vunpack.c.l.b16 %v650
    %v716 = vunpack.c.l.b16 %v651
    %v717 = vunpack.c.l.b16 %v652
    %v718 = vunpack.c.l.b16 %v653
    %v719 = vunpack.c.l.b16 %v654
    %v720 = vunpack.c.l.b16 %v655
    %v721 = vunpack.c.l.b16 %v656
    %v722 = vunpack.c.l.b16 %v657
    %v723 = vunpack.c.l.b16 %v658
    %v724 = vunpack.c.l.b16 %v659
    %v725 = vunpack.c.l.b16 %v660
    %v726 = vunpack.c.l.b16 %v661
    %v727 = vunpack.c.l.b16 %v662
    %v728 = vunpack.c.l.b16 %v663
    %v729 = vunpack.c.l.b16 %v664
    %v730 = vunpack.c.l.b16 %v665
    %v731 = vunpack.c.l.b16 %v666
    %v732 = vunpack.c.l.b16 %v667
    %v733 = vunpack.c.l.b16 %v668
    %v734 = vunpack.c.l.b16 %v669
    %v735 = vunpack.c.l.b16 %v670
    %v736 = vunpack.c.l.b16 %v671
    %v737 = vunpack.c.l.b16 %v672
    %v738 = vunpack.c.l.b16 %v673
    %v739 = vunpack.c.l.b16 %v674
    %v740 = vunpack.c.l.b16 %v675
    %v741 = vunpack.c.l.b16 %v676
    %v742 = vpack.c.b16 %v711, %v710
    %v743 = vpack.c.b16 %v713, %v712
    %v744 = vpack.c.b16 %v715, %v714
    %v745 = vpack.c.b16 %v717, %v716
    %v746 = vpack.c.b16 %v719, %v718
    %v747 = vpack.c.b16 %v721, %v720
    %v748 = vpack.c.b16 %v723, %v722
    %v749 = vpack.c.b16 %v725, %v724
    %v750 = vpack.c.b16 %v727, %v726
    %v751 = vpack.c.b16 %v729, %v728
    %v752 = vpack.c.b16 %v731, %v730
    %v753 = vpack.c.b16 %v733, %v732
    %v754 = vpack.c.b16 %v735, %v734
    %v755 = vpack.c.b16 %v737, %v736
    %v756 = vpack.c.b16 %v739, %v738
    %v757 = vpack.c.b16 %v741, %v740
    %774 = vmatprep.subr.bf16.mxu0 0
    %775 = vmatpush1.bf16.msra.mxu0 %v742
    %776 = vmatprep.subr.bf16.mxu0 0
    %777 = vmatpush1.bf16.msra.mxu0 %v743
    %778 = vmatprep.subr.bf16.mxu0 0
    %779 = vmatpush1.bf16.msra.mxu0 %v744
    %780 = vmatprep.subr.bf16.mxu0 0
    %781 = vmatpush1.bf16.msra.mxu0 %v745
    %782 = vmatprep.subr.bf16.mxu0 0
    %783 = vmatpush1.bf16.msra.mxu0 %v746
    %784 = vmatprep.subr.bf16.mxu0 0
    %785 = vmatpush1.bf16.msra.mxu0 %v747
    %786 = vmatprep.subr.bf16.mxu0 0
    %787 = vmatpush1.bf16.msra.mxu0 %v748
    %788 = vmatprep.subr.bf16.mxu0 0
    %789 = vmatpush1.bf16.msra.mxu0 %v749
    %790 = vmatprep.subr.bf16.mxu0 0
    %791 = vmatpush1.bf16.msra.mxu0 %v750
    %792 = vmatprep.subr.bf16.mxu0 0
    %793 = vmatpush1.bf16.msra.mxu0 %v751
    %794 = vmatprep.subr.bf16.mxu0 0
    %795 = vmatpush1.bf16.msra.mxu0 %v752
    %796 = vmatprep.subr.bf16.mxu0 0
    %797 = vmatpush1.bf16.msra.mxu0 %v753
    %798 = vmatprep.subr.bf16.mxu0 0
    %799 = vmatpush1.bf16.msra.mxu0 %v754
    %800 = vmatprep.subr.bf16.mxu0 0
    %801 = vmatpush1.bf16.msra.mxu0 %v755
    %802 = vmatprep.subr.bf16.mxu0 0
    %803 = vmatpush1.bf16.msra.mxu0 %v756
    %804 = vmatprep.subr.bf16.mxu0 0
    %805 = vmatpush1.bf16.msra.mxu0 %v757
    %806 = vmatprep.mubr.bf16.mxu0 %v644
    %807 = vmatmul.mubr.bf16.gmra.mrb[0].mxu0 %v643
    %v808 = vpop.f32.mrb[0].mxu0
    %v809 = vadd.f32 %v677, %v808
    %v810 = vpop.f32.mrb[0].mxu0
    %v811 = vpop.f32.mrb[0].mxu0
    %v812 = vpop.f32.mrb[0].mxu0
    %813 = vdwg.mxu0
    %vm814 = vcmask 1040384
    %v815 = vsel %vm814, %v809, -inf
    %816 = vmax.xlane.f32.xlu0 %v815
    %v817 = vpop.xlane.xlu0 %816
    %v818 = vsub.f32 %v809, %v817
    %v819 = vmul.f32 %v818, 1.442695
    %v820 = vpow.pop %v819
    %v821 = vsel %vm814, %v820, 0.0
    %822 = vadd.xlane.f32.xlu0 %v821
    %v823 = vpop.xlane.xlu0 %822
    %v824 = vlog2.pop %v823
    %v825 = vmul.f32 %v824, 0.6931472
    %v826 = vsub.f32 %v818, %v825
    %827 = vst [vmem:[#allocation10] sm:$0x1] %v826
    // Predicated region
    $region42: #{tpu_custom_call.1} parent=1 // pred_check
      _
    $region43: #{tpu_custom_call.1} parent=1 // pred_check_branch
      %829 = sbr.rel (0) target = $region45
    $region44: #{tpu_custom_call.1} parent=1 // pred_region
      %s831 = ssub.s32 16, 16
      %832 = vsyncadd [#allocation4], %s831
      %s834 = sshll.u32 [#allocation10], 4
      %s835 = int_to_ptr.vmem [resolvable:$true] %s834
      %837 = dma.vmem_to_hbm [thread:$0]  %s835, 16, %s6, [#allocation4]
    $region45: #{tpu_custom_call.1} parent=1 // pred_fallthru
      _
    // Predicated region
    $region46: #{tpu_custom_call.1} parent=1 // pred_check
      _
    $region47: #{tpu_custom_call.1} parent=1 // pred_check_branch
      %839 = sbr.rel (0) target = $region49
    $region48: #{tpu_custom_call.1} parent=1 // pred_region
      %840 = dma.done [#allocation4], 16
    $region49: #{tpu_custom_call.1} parent=1 // pred_fallthru
      _
    %841 = vsyncpa [#allocation3], 1
    %842 = vsyncpa [#allocation6], 1
    %843 = vsyncpa [#allocation9], 1
    %844 = vsyncpa [#allocation4], 1

</llo_original>
